<compile_context>
chip_gen: v7x
topology: tpu7x:2x2x1
jax: 0.10.0
libtpu: 0.0.40
codegen_flags: <defaults>
</compile_context>

<pallas_src>
import jax
import jax.numpy as jnp
from jax.experimental import pallas as pl
from jax.experimental.pallas import tpu as pltpu

_LANE = 128
_TARGET_BLOCK_BYTES = 4 * 1024 * 1024   # ~4 MiB blocks: 2x(in+out) ~16 MiB < 32 MiB scoped
_VMEM_LIMIT_BYTES = 32 * 1024 * 1024    # fits v5e/v6e (128 MiB phys) and v7x (64 MiB phys)


def _normalize_kernel(mean_ref, inv_std_ref, x_ref, o_ref):
    # mean_ref / inv_std_ref: VMEM (R, 1) float32; x_ref / o_ref: VMEM (R, C) input dtype.
    x = x_ref[...].astype(jnp.float32)
    o_ref[...] = ((x - mean_ref[...]) * inv_std_ref[...]).astype(o_ref.dtype)


def _pick_blocks(rows, cols, itemsize, target_bytes=_TARGET_BLOCK_BYTES):
    """Choose (block_rows, block_cols) honoring (sublane, lane) tiling and a VMEM budget."""
    row_pack = max(8, 32 // itemsize)   # sublane packing: 8 f32, 16 bf16/f16, 32 int8/fp8

    # --- column (lane) tiling: keep one row-pack of rows within budget -------
    if cols <= _LANE:
        block_cols = cols                                  # full dim: always legal
    else:
        max_cols = max(_LANE, (target_bytes // (row_pack * itemsize)) // _LANE * _LANE)
        block_cols = cols if cols <= max_cols else max_cols  # multiple of 128 when < cols

    # --- row (sublane) tiling: grow to fill the budget ------------------------
    if rows <= row_pack:
        block_rows = rows                                  # full dim: always legal
    else:
        row_bytes = block_cols * itemsize
        br = max(row_pack, (target_bytes // max(row_bytes, 1)) // row_pack * row_pack)
        block_rows = rows if br >= rows else br            # multiple of row_pack when < rows

    # --- keep >= 2 grid steps so v7x's second TensorCore isn't idle ----------
    grid_r = pl.cdiv(rows, block_rows)
    grid_c = pl.cdiv(cols, block_cols)
    if grid_r * grid_c < 2:
        if rows >= 2 * row_pack:
            block_rows = max(row_pack, (rows // 2) // row_pack * row_pack)
        elif cols >= 2 * _LANE:
            block_cols = max(_LANE, (cols // 2) // _LANE * _LANE)

    return block_rows, block_cols


def normalization_forward(img, mean, std, *, donate_img=False):
    """img: (N, C, H, W); mean/std: (C,). Returns (img - mean[:,None,None]) / std[:,None,None]."""
    N, C, H, W = img.shape
    rows = N * C
    cols = H * W
    dtype = img.dtype
    itemsize = jnp.dtype(dtype).itemsize

    # Lane-dense 2-D view: one row per (n, c) spatial plane.
    x2d = img.reshape(rows, cols)

    # Per-row constants (row = n*C + c -> channel c), kept in float32 for accuracy.
    mean_rows = jnp.tile(mean.astype(jnp.float32), N).reshape(rows, 1)
    inv_std_rows = jnp.tile(1.0 / std.astype(jnp.float32), N).reshape(rows, 1)

    block_rows, block_cols = _pick_blocks(rows, cols, itemsize)
    grid = (pl.cdiv(rows, block_rows), pl.cdiv(cols, block_cols))

    io_aliases = {2: 0} if donate_img else {}

    out2d = pl.pallas_call(
        _normalize_kernel,
        out_shape=jax.ShapeDtypeStruct((rows, cols), dtype),
        grid=grid,
        in_specs=[
            pl.BlockSpec((block_rows, 1), lambda i, j: (i, 0)),           # per-row mean (f32)
            pl.BlockSpec((block_rows, 1), lambda i, j: (i, 0)),           # per-row 1/std (f32)
            pl.BlockSpec((block_rows, block_cols), lambda i, j: (i, j)),  # image tile
        ],
        out_specs=pl.BlockSpec((block_rows, block_cols), lambda i, j: (i, j)),
        compiler_params=pltpu.CompilerParams(
            dimension_semantics=("parallel", "parallel"),
            vmem_limit_bytes=_VMEM_LIMIT_BYTES,
        ),
        input_output_aliases=io_aliases,
    )(mean_rows, inv_std_rows, x2d)

    return out2d.reshape(N, C, H, W)


if __name__ == "__main__":
    key = jax.random.PRNGKey(0)

    N, C, H, W = 2, 4, 16, 16
    img = jax.random.normal(key, (N, C, H, W), dtype=jnp.float32)

    # Deterministic per-channel normalization constants (module __init__ args).
    mean = jnp.array([0.485, 0.456, 0.406, 0.500], dtype=jnp.float32)
    std = jnp.array([0.229, 0.224, 0.225, 0.250], dtype=jnp.float32)

    # jit the wrapper so the tiny constant-building ops fuse into one dispatch.
    norm = jax.jit(normalization_forward)
    out = jax.block_until_ready(norm(img, mean, std))

    # Reference check (plain JAX broadcasting, mirrors (C,1,1) view in PyTorch).
    ref = (img - mean[:, None, None]) / std[:, None, None]
    assert out.shape == (N, C, H, W)
    assert jnp.allclose(out, ref, atol=1e-5, rtol=1e-5), float(jnp.max(jnp.abs(out - ref)))

    print("KERNEL_OK")
</pallas_src>

<mosaic_0001>
module attributes {stable_mosaic.version = 11 : i64} {
  func.func @_normalize_kernel(%arg0: i32, %arg1: i32, %arg2: memref<8x1xf32, #tpu.memory_space<vmem>>, %arg3: memref<8x1xf32, #tpu.memory_space<vmem>>, %arg4: memref<8x128xf32, #tpu.memory_space<vmem>>, %arg5: memref<8x128xf32, #tpu.memory_space<vmem>>) attributes {dimension_semantics = [#tpu.dimension_semantics<parallel>, #tpu.dimension_semantics<parallel>], iteration_bounds = array<i64: 1, 2>, scalar_prefetch = 0 : i64, scratch_operands = 0 : i64, tpu.core_type = #tpu.core_type<tc>, window_params = [{transform_indices = @transform_0, window_bounds = array<i64: 8, 1>}, {transform_indices = @transform_1, window_bounds = array<i64: 8, 1>}, {transform_indices = @transform_2, window_bounds = array<i64: 8, 128>}, {transform_indices = @transform_3, window_bounds = array<i64: 8, 128>}]} {
    %c0 = arith.constant 0 : index
    %c0_0 = arith.constant 0 : index
    %0 = vector.load %arg4[%c0, %c0_0] : memref<8x128xf32, #tpu.memory_space<vmem>>, vector<8x128xf32>
    %c0_1 = arith.constant 0 : index
    %c0_2 = arith.constant 0 : index
    %1 = vector.load %arg2[%c0_1, %c0_2] : memref<8x1xf32, #tpu.memory_space<vmem>>, vector<8x1xf32>
    %2 = vector.broadcast %1 : vector<8x1xf32> to vector<8x128xf32>
    %3 = arith.subf %0, %2 : vector<8x128xf32>
    %c0_3 = arith.constant 0 : index
    %c0_4 = arith.constant 0 : index
    %4 = vector.load %arg3[%c0_3, %c0_4] : memref<8x1xf32, #tpu.memory_space<vmem>>, vector<8x1xf32>
    %5 = vector.broadcast %4 : vector<8x1xf32> to vector<8x128xf32>
    %6 = arith.mulf %3, %5 : vector<8x128xf32>
    %c0_5 = arith.constant 0 : index
    %c0_6 = arith.constant 0 : index
    %7 = vector.load %arg5[%c0_5, %c0_6] : memref<8x128xf32, #tpu.memory_space<vmem>>, vector<8x128xf32>
    tpu.vector_store %arg5[%c0_5, %c0_6], %6 {strides = array<i32>} : memref<8x128xf32, #tpu.memory_space<vmem>>, vector<8x128xf32>,
    return
  }
  func.func @transform_0(%arg0: i32, %arg1: i32) -> (i32, i32) {
    %c0_i32 = arith.constant 0 : i32
    %c0_i32_0 = arith.constant 0 : i32
    return %arg0, %c0_i32 : i32, i32
  }
  func.func @transform_1(%arg0: i32, %arg1: i32) -> (i32, i32) {
    %c0_i32 = arith.constant 0 : i32
    %c0_i32_0 = arith.constant 0 : i32
    return %arg0, %c0_i32 : i32, i32
  }
  func.func @transform_2(%arg0: i32, %arg1: i32) -> (i32, i32) {
    %c0_i32 = arith.constant 0 : i32
    return %arg0, %arg1 : i32, i32
  }
  func.func @transform_3(%arg0: i32, %arg1: i32) -> (i32, i32) {
    %c0_i32 = arith.constant 0 : i32
    return %arg0, %arg1 : i32, i32
  }
}

</mosaic_0001>

<llo_original>
// kernel: tile.18
$region0: #{tile.18}
  #allocation0 [shape = 's32[1]{0}', space=sflag, size = 0x4, scoped, tag = 'scoped memory for tile.18']
  %s0 = inlined_call_operand.vmem [shape: f32[4], index: 0, kind: input, shape index: {}]
  %s1 = inlined_call_operand.vmem [shape: f32[2,4], index: 1, kind: output, shape index: {}]
  // Predicated region
  $region2: #{tile.18} parent=0 // pred_check
    _
  $region3: #{tile.18} parent=0 // pred_check_branch
    %3 = sbr.rel (0) target = $region5
  $region4: #{tile.18} parent=0 // pred_region
    _
  $region5: #{tile.18} parent=0 // pred_fallthru
    _
  %v4 = vld [vmem:[%s0] ss:$0 sm:$0xff]
  %5 = vst [vmem:[%s1] sm:$0x3] %v4

// kernel: tile.0
$region0: #{tile.0}
  %s0 = inlined_call_operand.vmem [shape: f32[2,4], index: 0, kind: input, shape index: {}]
  %s1 = inlined_call_operand.vmem [shape: f32[8,1], index: 1, kind: output, shape index: {}]
  $region1: #{tile.0} parent=0
    #allocation0 [shape = 'u8[4096]{0}', space=vmem, size = 0x1000, scoped, tag = 'scoped mem for input reshape']
    %s3 = sshllo.u32 0, 2
    %v4 = vld [vmem:[%s0] sm:%s3]
    %5 = vst [vmem:[#allocation0] sm:%s3] %v4
    %v6 = vld [vmem:[#allocation0] sm:$0x3]
    %vm7 = vcmask 7168
    %8 = vst.msk [vmem:[%s1] ss:$4 sm:$0x3] %vm7, %v6
    %v9 = vld [vmem:[#allocation0] sm:$0x3]
    %10 = vrot.lane.b32.xlu0 %v9, 127
    %v11 = vpop.permute.xlu0 %10
    %vm12 = vcmask 7168
    %s13 = scalar_lea.vmem %s1, 1
    %14 = vst.msk [vmem:[%s13] ss:$4 sm:$0x3] %vm12, %v11
    %v15 = vld [vmem:[#allocation0] sm:$0x3]
    %16 = vrot.lane.b32.xlu0 %v15, 126
    %v17 = vpop.permute.xlu0 %16
    %vm18 = vcmask 7168
    %s19 = scalar_lea.vmem %s1, 2
    %20 = vst.msk [vmem:[%s19] ss:$4 sm:$0x3] %vm18, %v17
    %v21 = vld [vmem:[#allocation0] sm:$0x3]
    %22 = vrot.lane.b32.xlu0 %v21, 125
    %v23 = vpop.permute.xlu0 %22
    %vm24 = vcmask 7168
    %s25 = scalar_lea.vmem %s1, 3
    %26 = vst.msk [vmem:[%s25] ss:$4 sm:$0x3] %vm24, %v23

// kernel: normalization_forward.1
$region0: #{normalization_forward.1}
  #allocation0 [shape = 'u32[]', space=smem, size = 0x4, offset = 0x4, fixed_abs, tag = 'smem constant byte address 0x4 - core index']
  #allocation1 [shape = 'u32[144,128]{1,0:T(1,128)}', space=vmem, size = 0x12000, scoped, tag = 'internal scratch']
  %s0 = inlined_call_operand.vmem [shape: f32[8,1], index: 0, kind: input, shape index: {}]
  %s1 = inlined_call_operand.vmem [shape: f32[8,1], index: 1, kind: input, shape index: {}]
  %s2 = inlined_call_operand.vmem [shape: f32[8,256], index: 2, kind: input, shape index: {}]
  %s3 = inlined_call_operand.vmem [shape: f32[8,256], index: 3, kind: output, shape index: {}]
  %s4 = sld [smem:[#allocation0]]
  $region45: #{normalization_forward.1} parent=0
    _
  %s6 = ssub.s32 1, %s4
  %s7 = scalar_select 0, %s6, %s4
  loop: start=0, step=1, limit=4
  $region2: #{normalization_forward.1} parent=0 // loop_pre_header
    _
  $region3: #{normalization_forward.1} parent=0 // loop_header
    %s9 = sphi 0, %s13
    %p10 = scmp.ge.s32.totalorder %s9, 4
    %s16 = sphi 0, %s28
    %s17 = sphi 0, %s24
    %s18 = sphi 0, %s16
    %s19 = sphi 0, %s17
    %s20 = sphi 0, %s18
    %s21 = sphi 0, %s19
    %s31 = sphi 0, %s33
    %s34 = sphi 0, %s31
    %s35 = sphi 0, %s34
    %s51 = sphi 0, %s35
    %s57 = sphi 0, %s59
    %s60 = sphi 0, %s57
    %s61 = sphi 0, %s60
    %s77 = sphi 0, %s61
    %s85 = sphi 0, %s87
    %s88 = sphi 0, %s85
    %s89 = sphi 0, %s88
    %s105 = sphi 0, %s89
    %s113 = sphi 0, %s115
    %s116 = sphi 0, %s113
    %s117 = sphi 0, %s116
    %s133 = sphi 0, %s117
  $region4: #{normalization_forward.1} parent=0 // loop_header_branch
    %12 = sbr.rel (%p10) target = $region8
  $region5: #{normalization_forward.1} parent=0 // loop_body
    %s14 = ssub.s32 %s9, 1
    %s15 = ssub.s32 %s9, 2
    %s22 = sadd.s32 1, %s17
    %p23 = scmp.ge.s32.totalorder %s22, 2
    %s24 = scalar_select %p23, 0, %s22
    %s25 = sadd.s32 1, %s16
    %s26 = scalar_select %p23, %s25, %s16
    %p27 = scmp.ge.s32.totalorder %s26, 1
    %s28 = scalar_select %p27, 0, %s26
    %s29 = ssub.s32 %s16, %s28
    %p30 = scmp.eq.s32.totalorder %s29, 0
    %s32 = sadd.s32 %s31, 1
    %s33 = scalar_select %p30, %s31, %s32
    %p36 = pneg %p30
    %p37 = scmp.eq.s32.totalorder %s9, 1
    %p38 = por %p36, %p37
    %p39 = scmp.ne.s32.totalorder %s31, %s34
    %p40 = scmp.eq.s32.totalorder %s9, 0
    %p41 = por %p39, %p40
    %p42 = scmp.ne.s32.totalorder %s31, %s34
    %p43 = scmp.eq.s32.totalorder %s14, 1
    %p44 = por %p42, %p43
    %p45 = scmp.ne.s32.totalorder %s34, %s35
    %p46 = scmp.eq.s32.totalorder %s14, 0
    %p47 = por %p45, %p46
    %p48 = scmp.ne.s32.totalorder %s34, %s35
    %p49 = scmp.eq.s32.totalorder %s15, 1
    %p50 = por %p48, %p49
    %p52 = scmp.ne.s32.totalorder %s35, %s51
    %p53 = scmp.eq.s32.totalorder %s15, 0
    %p54 = por %p52, %p53
    %s55 = ssub.s32 %s16, %s28
    %p56 = scmp.eq.s32.totalorder %s55, 0
    %s58 = sadd.s32 %s57, 1
    %s59 = scalar_select %p56, %s57, %s58
    %p62 = pneg %p56
    %p63 = scmp.eq.s32.totalorder %s9, 1
    %p64 = por %p62, %p63
    %p65 = scmp.ne.s32.totalorder %s57, %s60
    %p66 = scmp.eq.s32.totalorder %s9, 0
    %p67 = por %p65, %p66
    %p68 = scmp.ne.s32.totalorder %s57, %s60
    %p69 = scmp.eq.s32.totalorder %s14, 1
    %p70 = por %p68, %p69
    %p71 = scmp.ne.s32.totalorder %s60, %s61
    %p72 = scmp.eq.s32.totalorder %s14, 0
    %p73 = por %p71, %p72
    %p74 = scmp.ne.s32.totalorder %s60, %s61
    %p75 = scmp.eq.s32.totalorder %s15, 1
    %p76 = por %p74, %p75
    %p78 = scmp.ne.s32.totalorder %s61, %s77
    %p79 = scmp.eq.s32.totalorder %s15, 0
    %p80 = por %p78, %p79
    %s81 = ssub.s32 %s16, %s28
    %s82 = ssub.s32 %s17, %s24
    %s83 = sor.u32 %s81, %s82
    %p84 = scmp.eq.s32.totalorder %s83, 0
    %s86 = sadd.s32 %s85, 1
    %s87 = scalar_select %p84, %s85, %s86
    %p90 = pneg %p84
    %p91 = scmp.eq.s32.totalorder %s9, 1
    %p92 = por %p90, %p91
    %p93 = scmp.ne.s32.totalorder %s85, %s88
    %p94 = scmp.eq.s32.totalorder %s9, 0
    %p95 = por %p93, %p94
    %p96 = scmp.ne.s32.totalorder %s85, %s88
    %p97 = scmp.eq.s32.totalorder %s14, 1
    %p98 = por %p96, %p97
    %p99 = scmp.ne.s32.totalorder %s88, %s89
    %p100 = scmp.eq.s32.totalorder %s14, 0
    %p101 = por %p99, %p100
    %p102 = scmp.ne.s32.totalorder %s88, %s89
    %p103 = scmp.eq.s32.totalorder %s15, 1
    %p104 = por %p102, %p103
    %p106 = scmp.ne.s32.totalorder %s89, %s105
    %p107 = scmp.eq.s32.totalorder %s15, 0
    %p108 = por %p106, %p107
    %s109 = ssub.s32 %s16, %s28
    %s110 = ssub.s32 %s17, %s24
    %s111 = sor.u32 %s109, %s110
    %p112 = scmp.eq.s32.totalorder %s111, 0
    %s114 = sadd.s32 %s113, 1
    %s115 = scalar_select %p112, %s113, %s114
    %p118 = pneg %p112
    %p119 = scmp.eq.s32.totalorder %s9, 1
    %p120 = por %p118, %p119
    %p121 = scmp.ne.s32.totalorder %s113, %s116
    %p122 = scmp.eq.s32.totalorder %s9, 0
    %p123 = por %p121, %p122
    %p124 = scmp.ne.s32.totalorder %s113, %s116
    %p125 = scmp.eq.s32.totalorder %s14, 1
    %p126 = por %p124, %p125
    %p127 = scmp.ne.s32.totalorder %s116, %s117
    %p128 = scmp.eq.s32.totalorder %s14, 0
    %p129 = por %p127, %p128
    %p130 = scmp.ne.s32.totalorder %s116, %s117
    %p131 = scmp.eq.s32.totalorder %s15, 1
    %p132 = por %p130, %p131
    %p134 = scmp.ne.s32.totalorder %s117, %s133
    %p135 = scmp.eq.s32.totalorder %s15, 0
    %p136 = por %p134, %p135
    %p137 = scmp.le.s32.totalorder 1, %s9
    %p138 = scmp.lt.s32.totalorder %s9, 3
    %p139 = pnand %p137, %p138
    %p140 = pneg %p139
    // Predicated region
    $region9: #{normalization_forward.1} parent=5 // pred_check
      _
    $region10: #{normalization_forward.1} parent=5 // pred_check_branch
      %142 = sbr.rel (%p139) target = $region12
    $region11: #{normalization_forward.1} parent=5 // pred_region
      %s143 = ssub.s32 %s9, 1
      // Predicated region
      $region13: #{normalization_forward.1} parent=11 // pred_check
        %p144 = pneg %p47
      $region14: #{normalization_forward.1} parent=11 // pred_check_branch
        %146 = sbr.rel (%p144) target = $region16
      $region15: #{normalization_forward.1} parent=11 // pred_region
        %p147 = scmp.lt.s32.totalorder %s18, 0
        %s148 = scalar_select %p147, %s18, 0
        %s149 = smul.addr %s148, 8
        %s150 = scalar_lea.vmem %s0, %s149
      $region16: #{normalization_forward.1} parent=11 // pred_fallthru
        _
      // Predicated region
      $region17: #{normalization_forward.1} parent=11 // pred_check
        %p151 = pneg %p73
      $region18: #{normalization_forward.1} parent=11 // pred_check_branch
        %153 = sbr.rel (%p151) target = $region20
      $region19: #{normalization_forward.1} parent=11 // pred_region
        %p154 = scmp.lt.s32.totalorder %s18, 0
        %s155 = scalar_select %p154, %s18, 0
        %s156 = smul.addr %s155, 8
        %s157 = scalar_lea.vmem %s1, %s156
      $region20: #{normalization_forward.1} parent=11 // pred_fallthru
        _
    $region12: #{normalization_forward.1} parent=5 // pred_fallthru
      _
    %p158 = scmp.lt.s32.totalorder %s9, 2
    // Predicated region
    $region21: #{normalization_forward.1} parent=5 // pred_check
      %p159 = pneg %p158
    $region22: #{normalization_forward.1} parent=5 // pred_check_branch
      %161 = sbr.rel (%p159) target = $region24
    $region23: #{normalization_forward.1} parent=5 // pred_region
      // Predicated region
      $region25: #{normalization_forward.1} parent=23 // pred_check
        %p162 = pneg %p95
      $region26: #{normalization_forward.1} parent=23 // pred_check_branch
        %164 = sbr.rel (%p162) target = $region28
      $region27: #{normalization_forward.1} parent=23 // pred_region
        %p165 = scmp.lt.s32.totalorder %s16, 0
        %s166 = scalar_select %p165, %s16, 0
        %p167 = scmp.lt.s32.totalorder %s17, 1
        %s168 = scalar_select %p167, %s17, 1
        %s169 = smul.addr %s166, 2
        %s170 = sadd.s32 %s168, %s169
        %s171 = smul.addr %s170, 8
        %s172 = scalar_lea.vmem %s2, %s171
      $region28: #{normalization_forward.1} parent=23 // pred_fallthru
        _
    $region24: #{normalization_forward.1} parent=5 // pred_fallthru
      _
    %p173 = scmp.le.s32.totalorder 1, %s9
    %p174 = scmp.lt.s32.totalorder %s9, 3
    %p175 = pnand %p173, %p174
    %p176 = pneg %p175
    // Predicated region
    $region29: #{normalization_forward.1} parent=5 // pred_check
      _
    $region30: #{normalization_forward.1} parent=5 // pred_check_branch
      %178 = sbr.rel (%p175) target = $region32
    $region31: #{normalization_forward.1} parent=5 // pred_region
      %s179 = ssub.s32 %s9, 1
      %p180 = scmp.lt.s32.totalorder %s18, 0
      %s181 = scalar_select %p180, %s18, 0
      %s182 = smul.addr %s181, 8
      %s183 = scalar_lea.vmem %s0, %s182
      %p184 = pneg %p47
      %p185 = pneg %p44
      %p186 = scmp.lt.s32.totalorder %s18, 0
      %s187 = scalar_select %p186, %s18, 0
      %s188 = smul.addr %s187, 8
      %s189 = scalar_lea.vmem %s1, %s188
      %p190 = pneg %p73
      %p191 = pneg %p70
      %p192 = scmp.lt.s32.totalorder %s18, 0
      %s193 = scalar_select %p192, %s18, 0
      %p194 = scmp.lt.s32.totalorder %s19, 1
      %s195 = scalar_select %p194, %s19, 1
      %s196 = smul.addr %s193, 2
      %s197 = sadd.s32 %s195, %s196
      %s198 = smul.addr %s197, 8
      %s199 = scalar_lea.vmem %s2, %s198
      %p200 = pneg %p101
      %p201 = pneg %p98
      %p202 = pneg %p129
      %p203 = pneg %p126
      %p204 = scmp.lt.s32.totalorder %s18, 0
      %s205 = scalar_select %p204, %s18, 0
      %p206 = scmp.lt.s32.totalorder %s19, 1
      %s207 = scalar_select %p206, %s19, 1
      %s208 = smul.addr %s205, 2
      %s209 = sadd.s32 %s207, %s208
      %s210 = smul.addr %s209, 8
      %s211 = scalar_lea.vmem %s3, %s210
      %p212 = scmp.lt.s32.totalorder %s18, 0
      %s213 = scalar_select %p212, %s18, 0
      %s214 = smul.addr %s213, 8
      %s215 = scalar_lea.vmem %s0, %s214
      %p216 = scmp.lt.s32.totalorder %s18, 0
      %s217 = scalar_select %p216, %s18, 0
      %s218 = smul.addr %s217, 8
      %s219 = scalar_lea.vmem %s1, %s218
      %p220 = scmp.lt.s32.totalorder %s18, 0
      %s221 = scalar_select %p220, %s18, 0
      %p222 = scmp.lt.s32.totalorder %s19, 1
      %s223 = scalar_select %p222, %s19, 1
      %s224 = smul.addr %s221, 2
      %s225 = sadd.s32 %s223, %s224
      %s226 = smul.addr %s225, 8
      %s227 = scalar_lea.vmem %s2, %s226
      %p228 = scmp.lt.s32.totalorder %s18, 0
      %s229 = scalar_select %p228, %s18, 0
      %p230 = scmp.lt.s32.totalorder %s19, 1
      %s231 = scalar_select %p230, %s19, 1
      %s232 = smul.addr %s229, 2
      %s233 = sadd.s32 %s231, %s232
      %s234 = smul.addr %s233, 8
      %s235 = scalar_lea.vmem %s3, %s234
      %v236 = vld [vmem:[%s227] sm:$0xff]
      %v237 = vld [vmem:[%s215] sm:$0xff]
      %239 = vset.pattern.permute.xlu0 0
      %240 = vperm.xlu0 %239, %v237
      %v241 = vpop.permute.xlu0 %240
      %v243 = vsub.f32 %v236, %v241
      %v244 = vld [vmem:[%s219] sm:$0xff]
      %246 = vset.pattern.permute.xlu0 0
      %247 = vperm.xlu0 %246, %v244
      %v248 = vpop.permute.xlu0 %247
      %v250 = vmul.f32 %v243, %v248
      %251 = vst [vmem:[%s235] sm:$0xff] %v250
      %p252 = scmp.lt.s32.totalorder %s18, 0
      %s253 = scalar_select %p252, %s18, 0
      %p254 = scmp.lt.s32.totalorder %s19, 1
      %s255 = scalar_select %p254, %s19, 1
      %s256 = smul.addr %s253, 2
      %s257 = sadd.s32 %s255, %s256
      %s258 = smul.addr %s257, 8
      %s259 = scalar_lea.vmem %s3, %s258
      // Predicated region
      $region33: #{normalization_forward.1} parent=31 // pred_check
        %p260 = pneg %p126
      $region34: #{normalization_forward.1} parent=31 // pred_check_branch
        %262 = sbr.rel (%p260) target = $region36
      $region35: #{normalization_forward.1} parent=31 // pred_region
        _
      $region36: #{normalization_forward.1} parent=31 // pred_fallthru
        _
    $region32: #{normalization_forward.1} parent=5 // pred_fallthru
      _
    %p263 = scmp.le.s32.totalorder 2, %s9
    // Predicated region
    $region37: #{normalization_forward.1} parent=5 // pred_check
      %p264 = pneg %p263
    $region38: #{normalization_forward.1} parent=5 // pred_check_branch
      %266 = sbr.rel (%p264) target = $region40
    $region39: #{normalization_forward.1} parent=5 // pred_region
      %s267 = ssub.s32 %s9, 2
      // Predicated region
      $region41: #{normalization_forward.1} parent=39 // pred_check
        %p268 = pneg %p132
      $region42: #{normalization_forward.1} parent=39 // pred_check_branch
        %270 = sbr.rel (%p268) target = $region44
      $region43: #{normalization_forward.1} parent=39 // pred_region
        %p271 = scmp.lt.s32.totalorder %s20, 0
        %s272 = scalar_select %p271, %s20, 0
        %p273 = scmp.lt.s32.totalorder %s21, 1
        %s274 = scalar_select %p273, %s21, 1
        %s275 = smul.addr %s272, 2
        %s276 = sadd.s32 %s274, %s275
        %s277 = smul.addr %s276, 8
        %s278 = scalar_lea.vmem %s3, %s277
      $region44: #{normalization_forward.1} parent=39 // pred_fallthru
        _
    $region40: #{normalization_forward.1} parent=5 // pred_fallthru
      _
  $region6: #{normalization_forward.1} parent=0 // loop_footer
    %s13 = sadd.s32 1, %s9
  $region7: #{normalization_forward.1} parent=0 // loop_footer_branch
    %8 = sbr.rel target = $region3
  $region8: #{normalization_forward.1} parent=0 // loop_exit
    _

</llo_original>
